<compile_context>
chip_gen: v7x
topology: tpu7x:2x2x1
jax: 0.10.0
libtpu: 0.0.40
codegen_flags: <defaults>
</compile_context>

<pallas_src>
import functools

import numpy as np
import jax
import jax.numpy as jnp
from jax.experimental import pallas as pl
from jax.experimental.pallas import tpu as pltpu

_LANES = 128
_MAX_BLOCK_BYTES = 4 * 1024 * 1024   # per-input, per-block VMEM footprint
_EPS = 1e-6


def _loss_stats_kernel(x_ref, y_ref, out_ref,
                       acc_sq, acc_ab, acc_xy, acc_x, acc_y,
                       *, block_rows, valid_rows, steps_per_core,
                       last_block, needs_mask):
    """Accumulates the five reduction statistics needed by mse/l1/dice.

    x_ref, y_ref : (block_rows, 128) tiles in the inputs' native dtype.
    out_ref      : (1, 5, 128) per-core result block (written in epilogue):
                     row 0: sum((x-y)^2)  row 1: sum(|x-y|)  row 2: sum(x*y)
                     row 3: sum(x)        row 4: sum(y)
    acc_*        : (1, 128) f32 VMEM scratch (per-lane partial sums).
    """
    c = pl.program_id(0)
    j = pl.program_id(1)

    @pl.when(j == 0)
    def _():
        acc_sq[...] = jnp.zeros_like(acc_sq)
        acc_ab[...] = jnp.zeros_like(acc_ab)
        acc_xy[...] = jnp.zeros_like(acc_xy)
        acc_x[...] = jnp.zeros_like(acc_x)
        acc_y[...] = jnp.zeros_like(acc_y)

    def accumulate(x, y):
        d = x - y
        acc_sq[...] += jnp.sum(d * d, axis=0, keepdims=True)
        acc_ab[...] += jnp.sum(jnp.abs(d), axis=0, keepdims=True)
        acc_xy[...] += jnp.sum(x * y, axis=0, keepdims=True)
        acc_x[...] += jnp.sum(x, axis=0, keepdims=True)
        acc_y[...] += jnp.sum(y, axis=0, keepdims=True)

    x = x_ref[...].astype(jnp.float32)
    y = y_ref[...].astype(jnp.float32)

    if not needs_mask:
        accumulate(x, y)
    else:
        logical_block = c * steps_per_core + j

        # Interior blocks: no masking work at all.
        @pl.when(logical_block < last_block)
        def _():
            accumulate(x, y)

        # Ragged-tail block (>= covers any clamped/duplicate block too):
        # zero rows past the end of the slab before accumulating.
        @pl.when(logical_block >= last_block)
        def _():
            g_row = (logical_block * block_rows
                     + jax.lax.broadcasted_iota(jnp.int32,
                                                (block_rows, _LANES), 0))
            in_bounds = g_row < valid_rows
            accumulate(jnp.where(in_bounds, x, 0.0),
                       jnp.where(in_bounds, y, 0.0))

    @pl.when(j == pl.num_programs(1) - 1)
    def _():
        # Direct sublane-row stores; no concatenate / relayout in the epilogue.
        out_ref[0, 0:1, :] = acc_sq[...]
        out_ref[0, 1:2, :] = acc_ab[...]
        out_ref[0, 2:3, :] = acc_xy[...]
        out_ref[0, 3:4, :] = acc_x[...]
        out_ref[0, 4:5, :] = acc_y[...]


def _compute_loss_stats(x2d, y2d):
    """x2d, y2d: (rows, 128) slabs in native dtype. Returns the 5 stats."""
    assert x2d.shape == y2d.shape
    rows = x2d.shape[0]
    itemsize = jnp.dtype(x2d.dtype).itemsize
    # 8192 rows for f32, 16384 for bf16 -> 4 MiB per input block.
    max_block_rows = max(8, _MAX_BLOCK_BYTES // (_LANES * itemsize))

    if rows <= max_block_rows:
        block_rows = rows               # full-dim block: always a legal tile
    else:
        block_rows = max_block_rows     # multiple of 32: legal for any dtype

    total_blocks = pl.cdiv(rows, block_rows)
    # Split across the leading "parallel" axis only when it divides evenly:
    # never creates phantom blocks, and on 1-TC chips (v5e/v6e) the split is
    # just a harmless serial loop while v7x gets megacore parallelism.
    num_cores = 2 if (total_blocks >= 2 and total_blocks % 2 == 0) else 1
    steps_per_core = total_blocks // num_cores
    needs_mask = (total_blocks * block_rows) != rows
    last_block = total_blocks - 1

    def in_map(c, j):
        return (c * steps_per_core + j, 0)

    kernel = functools.partial(
        _loss_stats_kernel,
        block_rows=block_rows, valid_rows=rows,
        steps_per_core=steps_per_core, last_block=last_block,
        needs_mask=needs_mask)

    out = pl.pallas_call(
        kernel,
        out_shape=jax.ShapeDtypeStruct((num_cores, 5, _LANES), jnp.float32),
        grid_spec=pltpu.PrefetchScalarGridSpec(
            num_scalar_prefetch=0,
            grid=(num_cores, steps_per_core),
            in_specs=[
                pl.BlockSpec((block_rows, _LANES), in_map),
                pl.BlockSpec((block_rows, _LANES), in_map),
            ],
            out_specs=pl.BlockSpec((1, 5, _LANES), lambda c, j: (c, 0, 0)),
            scratch_shapes=[pltpu.VMEM((1, _LANES), jnp.float32)] * 5,
        ),
        compiler_params=pltpu.CompilerParams(
            dimension_semantics=("parallel", "arbitrary"),
            vmem_limit_bytes=32 * 1024 * 1024,   # safe on v5e/v6e/v7x
        ),
    )(x2d, y2d)

    sums = jnp.sum(out, axis=(0, 2))  # (5,)
    return sums[0], sums[1], sums[2], sums[3], sums[4]


def _to_slab(x):
    """Flatten to a lane-dense (rows, 128) slab, keeping the native dtype."""
    flat = x.reshape(-1)
    n = flat.shape[0]
    if n % _LANES != 0:
        # TODO(synk): this pad is a full-array copy; numel % 128 == 0 is the
        # common case for image tensors so this path is rarely taken.
        flat = jnp.pad(flat, (0, _LANES - n % _LANES))
    return flat.reshape(-1, _LANES)


class GetLossFunction:
    """JAX/Pallas port of get_loss_function(args) with
    args.loss = ['mse', 'l1', 'dice'], args.loss_weights = [1.0, 0.5, 0.25]."""

    def __init__(self, loss_types=("mse", "l1", "dice"),
                 weights=(1.0, 0.5, 0.25)):
        self.loss_types = list(loss_types)
        self.weights = [float(w) for w in weights]
        if len(self.loss_types) > 1 and len(self.loss_types) != len(self.weights):
            raise ValueError("# of loss types != # of weights")
        print(f"[INFO] Loss function : {list(zip(self.loss_types, self.weights))}")
        self._jitted = jax.jit(self._device_fn)

    def _device_fn(self, inp, target):
        x2d = _to_slab(inp)
        y2d = _to_slab(target)
        sse, sae, sxy, sx, sy = _compute_loss_stats(x2d, y2d)
        n = jnp.float32(inp.size)

        values = []
        for lt in self.loss_types:
            lt_l = lt.lower()
            if lt_l == "mse":
                values.append(sse / n)
            elif lt_l == "l1":
                values.append(sae / n)
            elif lt_l == "dice":
                # DiceLoss.forward: dice = 1 - (2*I+eps)/(sum_x+sum_y+eps);
                # return 1 - dice  (i.e. the coefficient), exactly as in the
                # PyTorch source.
                dice = 1.0 - (2.0 * sxy + _EPS) / (sx + sy + _EPS)
                values.append(1.0 - dice)
            else:
                raise ValueError(f"[ERROR] Invalid / untranslated loss type ({lt})")

        total = jnp.float32(0.0)
        for w, v in zip(self.weights, values):
            total = total + jnp.float32(w) * v
        return jnp.stack([total] + values)   # (1 + num_losses,)

    def __call__(self, inp, target):
        # input/target: NCHW arrays of identical shape (any float dtype).
        assert inp.shape == target.shape
        res = self._jitted(inp, target)
        res = jax.block_until_ready(res)
        # One host transfer for every loss scalar (no per-loss .item() syncs).
        host = np.asarray(jax.device_get(res))

        total_loss = res[0]   # device scalar, mirrors the torch tensor total
        loss_dict = {lt: 0.0 for lt in self.loss_types}
        for i, (lt, w) in enumerate(zip(self.loss_types, self.weights)):
            loss_dict[lt] += w * float(host[1 + i])
        return total_loss, loss_dict


def _reference_total(a, b):
    a = a.astype(jnp.float32)
    b = b.astype(jnp.float32)
    d = a - b
    mse = jnp.mean(d * d)
    l1 = jnp.mean(jnp.abs(d))
    dice_loss = (2.0 * jnp.sum(a * b) + _EPS) / (jnp.sum(a) + jnp.sum(b) + _EPS)
    return 1.0 * mse + 0.5 * l1 + 0.25 * dice_loss


if __name__ == "__main__":
    key = jax.random.PRNGKey(0)
    k1, k2, k3, k4, k5, k6, k7, k8 = jax.random.split(key, 8)

    loss_fn = GetLossFunction(loss_types=["mse", "l1", "dice"],
                              weights=[1.0, 0.5, 0.25])

    # 1) Small NCHW f32 inputs (single block, no masking).
    x = jax.random.uniform(k1, (2, 4, 16, 16), dtype=jnp.float32)
    y = jax.random.uniform(k2, (2, 4, 16, 16), dtype=jnp.float32)
    total_loss, loss_dict = loss_fn(x, y)
    total_loss = jax.block_until_ready(total_loss)
    assert jnp.allclose(total_loss, _reference_total(x, y),
                        rtol=1e-5, atol=1e-5), (total_loss, _reference_total(x, y))

    # 2) bf16 inputs exercise the native-dtype DMA + in-kernel upcast path.
    xb = jax.random.uniform(k3, (2, 3, 96, 100), dtype=jnp.float32).astype(jnp.bfloat16)
    yb = jax.random.uniform(k4, (2, 3, 96, 100), dtype=jnp.float32).astype(jnp.bfloat16)
    tb, _ = loss_fn(xb, yb)
    tb = jax.block_until_ready(tb)
    assert jnp.allclose(tb, _reference_total(xb, yb), rtol=1e-3, atol=1e-3), (
        tb, _reference_total(xb, yb))

    # 3) Larger input: multiple blocks, 2-core split, masked ragged-tail block
    #    (only the last block takes the masked path).
    xl = jax.random.uniform(k5, (1, 3, 512, 800), dtype=jnp.float32)
    yl = jax.random.uniform(k6, (1, 3, 512, 800), dtype=jnp.float32)
    tl, _ = loss_fn(xl, yl)
    tl = jax.block_until_ready(tl)
    assert jnp.allclose(tl, _reference_total(xl, yl), rtol=1e-4, atol=1e-5), (
        tl, _reference_total(xl, yl))

    # 4) numel not a multiple of 128 -> wrapper zero-pad path.
    xs = jax.random.uniform(k7, (2, 3, 5, 7), dtype=jnp.float32)
    ys = jax.random.uniform(k8, (2, 3, 5, 7), dtype=jnp.float32)
    ts, _ = loss_fn(xs, ys)
    ts = jax.block_until_ready(ts)
    assert jnp.allclose(ts, _reference_total(xs, ys), rtol=1e-5, atol=1e-5), (
        ts, _reference_total(xs, ys))

    print("KERNEL_OK")
</pallas_src>

<mosaic_0001>
module attributes {stable_mosaic.version = 11 : i64} {
  func.func @_loss_stats_kernel(%arg0: i32, %arg1: i32, %arg2: memref<16x128xf32, #tpu.memory_space<vmem>>, %arg3: memref<16x128xf32, #tpu.memory_space<vmem>>, %arg4: memref<1x5x128xf32, #tpu.memory_space<vmem>>, %arg5: memref<1x128xf32, #tpu.memory_space<vmem>>, %arg6: memref<1x128xf32, #tpu.memory_space<vmem>>, %arg7: memref<1x128xf32, #tpu.memory_space<vmem>>, %arg8: memref<1x128xf32, #tpu.memory_space<vmem>>, %arg9: memref<1x128xf32, #tpu.memory_space<vmem>>) attributes {dimension_semantics = [#tpu.dimension_semantics<parallel>, #tpu.dimension_semantics<arbitrary>], iteration_bounds = array<i64: 1, 1>, scalar_prefetch = 0 : i64, scratch_operands = 5 : i64, tpu.core_type = #tpu.core_type<tc>, window_params = [{transform_indices = @transform_0, window_bounds = array<i64: 16, 128>}, {transform_indices = @transform_1, window_bounds = array<i64: 16, 128>}, {transform_indices = @transform_2, window_bounds = array<i64: 1, 5, 128>}]} {
    %c0_i32 = arith.constant 0 : i32
    %0 = arith.cmpi eq, %arg1, %c0_i32 : i32
    %1 = arith.extui %0 : i1 to i32
    %c0_i32_0 = arith.constant 0 : i32
    %2 = arith.cmpi ne, %1, %c0_i32_0 : i32
    scf.if %2 {
      %cst_30 = arith.constant 0.000000e+00 : f32
      %37 = vector.broadcast %cst_30 : f32 to vector<1x128xf32>
      %c0_31 = arith.constant 0 : index
      %c0_32 = arith.constant 0 : index
      %38 = vector.load %arg5[%c0_31, %c0_32] : memref<1x128xf32, #tpu.memory_space<vmem>>, vector<1x128xf32>
      tpu.vector_store %arg5[%c0_31, %c0_32], %37 {strides = array<i32>} : memref<1x128xf32, #tpu.memory_space<vmem>>, vector<1x128xf32>,
      %cst_33 = arith.constant 0.000000e+00 : f32
      %39 = vector.broadcast %cst_33 : f32 to vector<1x128xf32>
      %c0_34 = arith.constant 0 : index
      %c0_35 = arith.constant 0 : index
      %40 = vector.load %arg6[%c0_34, %c0_35] : memref<1x128xf32, #tpu.memory_space<vmem>>, vector<1x128xf32>
      tpu.vector_store %arg6[%c0_34, %c0_35], %39 {strides = array<i32>} : memref<1x128xf32, #tpu.memory_space<vmem>>, vector<1x128xf32>,
      %cst_36 = arith.constant 0.000000e+00 : f32
      %41 = vector.broadcast %cst_36 : f32 to vector<1x128xf32>
      %c0_37 = arith.constant 0 : index
      %c0_38 = arith.constant 0 : index
      %42 = vector.load %arg7[%c0_37, %c0_38] : memref<1x128xf32, #tpu.memory_space<vmem>>, vector<1x128xf32>
      tpu.vector_store %arg7[%c0_37, %c0_38], %41 {strides = array<i32>} : memref<1x128xf32, #tpu.memory_space<vmem>>, vector<1x128xf32>,
      %cst_39 = arith.constant 0.000000e+00 : f32
      %43 = vector.broadcast %cst_39 : f32 to vector<1x128xf32>
      %c0_40 = arith.constant 0 : index
      %c0_41 = arith.constant 0 : index
      %44 = vector.load %arg8[%c0_40, %c0_41] : memref<1x128xf32, #tpu.memory_space<vmem>>, vector<1x128xf32>
      tpu.vector_store %arg8[%c0_40, %c0_41], %43 {strides = array<i32>} : memref<1x128xf32, #tpu.memory_space<vmem>>, vector<1x128xf32>,
      %cst_42 = arith.constant 0.000000e+00 : f32
      %45 = vector.broadcast %cst_42 : f32 to vector<1x128xf32>
      %c0_43 = arith.constant 0 : index
      %c0_44 = arith.constant 0 : index
      %46 = vector.load %arg9[%c0_43, %c0_44] : memref<1x128xf32, #tpu.memory_space<vmem>>, vector<1x128xf32>
      tpu.vector_store %arg9[%c0_43, %c0_44], %45 {strides = array<i32>} : memref<1x128xf32, #tpu.memory_space<vmem>>, vector<1x128xf32>,
    } else {
    }
    %c0 = arith.constant 0 : index
    %c0_1 = arith.constant 0 : index
    %3 = vector.load %arg2[%c0, %c0_1] : memref<16x128xf32, #tpu.memory_space<vmem>>, vector<16x128xf32>
    %c0_2 = arith.constant 0 : index
    %c0_3 = arith.constant 0 : index
    %4 = vector.load %arg3[%c0_2, %c0_3] : memref<16x128xf32, #tpu.memory_space<vmem>>, vector<16x128xf32>
    %5 = arith.subf %3, %4 : vector<16x128xf32>
    %c0_4 = arith.constant 0 : index
    %c0_5 = arith.constant 0 : index
    %6 = vector.load %arg5[%c0_4, %c0_5] : memref<1x128xf32, #tpu.memory_space<vmem>>, vector<1x128xf32>
    %7 = arith.mulf %5, %5 : vector<16x128xf32>
    %cst = arith.constant dense<0.000000e+00> : vector<128xf32>
    %8 = vector.multi_reduction <add>, %7, %cst [0] : vector<16x128xf32> to vector<128xf32>
    %9 = vector.shape_cast %8 : vector<128xf32> to vector<1x128xf32>
    %10 = arith.addf %6, %9 : vector<1x128xf32>
    %c0_6 = arith.constant 0 : index
    %c0_7 = arith.constant 0 : index
    %11 = vector.load %arg5[%c0_6, %c0_7] : memref<1x128xf32, #tpu.memory_space<vmem>>, vector<1x128xf32>
    tpu.vector_store %arg5[%c0_6, %c0_7], %10 {strides = array<i32>} : memref<1x128xf32, #tpu.memory_space<vmem>>, vector<1x128xf32>,
    %c0_8 = arith.constant 0 : index
    %c0_9 = arith.constant 0 : index
    %12 = vector.load %arg6[%c0_8, %c0_9] : memref<1x128xf32, #tpu.memory_space<vmem>>, vector<1x128xf32>
    %13 = math.absf %5 : vector<16x128xf32>
    %cst_10 = arith.constant dense<0.000000e+00> : vector<128xf32>
    %14 = vector.multi_reduction <add>, %13, %cst_10 [0] : vector<16x128xf32> to vector<128xf32>
    %15 = vector.shape_cast %14 : vector<128xf32> to vector<1x128xf32>
    %16 = arith.addf %12, %15 : vector<1x128xf32>
    %c0_11 = arith.constant 0 : index
    %c0_12 = arith.constant 0 : index
    %17 = vector.load %arg6[%c0_11, %c0_12] : memref<1x128xf32, #tpu.memory_space<vmem>>, vector<1x128xf32>
    tpu.vector_store %arg6[%c0_11, %c0_12], %16 {strides = array<i32>} : memref<1x128xf32, #tpu.memory_space<vmem>>, vector<1x128xf32>,
    %c0_13 = arith.constant 0 : index
    %c0_14 = arith.constant 0 : index
    %18 = vector.load %arg7[%c0_13, %c0_14] : memref<1x128xf32, #tpu.memory_space<vmem>>, vector<1x128xf32>
    %19 = arith.mulf %3, %4 : vector<16x128xf32>
    %cst_15 = arith.constant dense<0.000000e+00> : vector<128xf32>
    %20 = vector.multi_reduction <add>, %19, %cst_15 [0] : vector<16x128xf32> to vector<128xf32>
    %21 = vector.shape_cast %20 : vector<128xf32> to vector<1x128xf32>
    %22 = arith.addf %18, %21 : vector<1x128xf32>
    %c0_16 = arith.constant 0 : index
    %c0_17 = arith.constant 0 : index
    %23 = vector.load %arg7[%c0_16, %c0_17] : memref<1x128xf32, #tpu.memory_space<vmem>>, vector<1x128xf32>
    tpu.vector_store %arg7[%c0_16, %c0_17], %22 {strides = array<i32>} : memref<1x128xf32, #tpu.memory_space<vmem>>, vector<1x128xf32>,
    %c0_18 = arith.constant 0 : index
    %c0_19 = arith.constant 0 : index
    %24 = vector.load %arg8[%c0_18, %c0_19] : memref<1x128xf32, #tpu.memory_space<vmem>>, vector<1x128xf32>
    %cst_20 = arith.constant dense<0.000000e+00> : vector<128xf32>
    %25 = vector.multi_reduction <add>, %3, %cst_20 [0] : vector<16x128xf32> to vector<128xf32>
    %26 = vector.shape_cast %25 : vector<128xf32> to vector<1x128xf32>
    %27 = arith.addf %24, %26 : vector<1x128xf32>
    %c0_21 = arith.constant 0 : index
    %c0_22 = arith.constant 0 : index
    %28 = vector.load %arg8[%c0_21, %c0_22] : memref<1x128xf32, #tpu.memory_space<vmem>>, vector<1x128xf32>
    tpu.vector_store %arg8[%c0_21, %c0_22], %27 {strides = array<i32>} : memref<1x128xf32, #tpu.memory_space<vmem>>, vector<1x128xf32>,
    %c0_23 = arith.constant 0 : index
    %c0_24 = arith.constant 0 : index
    %29 = vector.load %arg9[%c0_23, %c0_24] : memref<1x128xf32, #tpu.memory_space<vmem>>, vector<1x128xf32>
    %cst_25 = arith.constant dense<0.000000e+00> : vector<128xf32>
    %30 = vector.multi_reduction <add>, %4, %cst_25 [0] : vector<16x128xf32> to vector<128xf32>
    %31 = vector.shape_cast %30 : vector<128xf32> to vector<1x128xf32>
    %32 = arith.addf %29, %31 : vector<1x128xf32>
    %c0_26 = arith.constant 0 : index
    %c0_27 = arith.constant 0 : index
    %33 = vector.load %arg9[%c0_26, %c0_27] : memref<1x128xf32, #tpu.memory_space<vmem>>, vector<1x128xf32>
    tpu.vector_store %arg9[%c0_26, %c0_27], %32 {strides = array<i32>} : memref<1x128xf32, #tpu.memory_space<vmem>>, vector<1x128xf32>,
    %c0_i32_28 = arith.constant 0 : i32
    %34 = arith.cmpi eq, %arg1, %c0_i32_28 : i32
    %35 = arith.extui %34 : i1 to i32
    %c0_i32_29 = arith.constant 0 : i32
    %36 = arith.cmpi ne, %35, %c0_i32_29 : i32
    scf.if %36 {
      %c0_30 = arith.constant 0 : index
      %c0_31 = arith.constant 0 : index
      %37 = vector.load %arg5[%c0_30, %c0_31] : memref<1x128xf32, #tpu.memory_space<vmem>>, vector<1x128xf32>
      %c0_32 = arith.constant 0 : index
      %c0_33 = arith.constant 0 : index
      %c0_34 = arith.constant 0 : index
      %38 = vector.load %arg4[%c0_32, %c0_33, %c0_34] : memref<1x5x128xf32, #tpu.memory_space<vmem>>, vector<1x1x128xf32>
      %39 = vector.shape_cast %38 : vector<1x1x128xf32> to vector<1x128xf32>
      %40 = vector.shape_cast %37 : vector<1x128xf32> to vector<1x1x128xf32>
      tpu.vector_store %arg4[%c0_32, %c0_33, %c0_34], %40 {strides = array<i32>} : memref<1x5x128xf32, #tpu.memory_space<vmem>>, vector<1x1x128xf32>,
      %c0_35 = arith.constant 0 : index
      %c0_36 = arith.constant 0 : index
      %41 = vector.load %arg6[%c0_35, %c0_36] : memref<1x128xf32, #tpu.memory_space<vmem>>, vector<1x128xf32>
      %c0_37 = arith.constant 0 : index
      %c1 = arith.constant 1 : index
      %c0_38 = arith.constant 0 : index
      %42 = vector.load %arg4[%c0_37, %c1, %c0_38] : memref<1x5x128xf32, #tpu.memory_space<vmem>>, vector<1x1x128xf32>
      %43 = vector.shape_cast %42 : vector<1x1x128xf32> to vector<1x128xf32>
      %44 = vector.shape_cast %41 : vector<1x128xf32> to vector<1x1x128xf32>
      tpu.vector_store %arg4[%c0_37, %c1, %c0_38], %44 {strides = array<i32>} : memref<1x5x128xf32, #tpu.memory_space<vmem>>, vector<1x1x128xf32>,
      %c0_39 = arith.constant 0 : index
      %c0_40 = arith.constant 0 : index
      %45 = vector.load %arg7[%c0_39, %c0_40] : memref<1x128xf32, #tpu.memory_space<vmem>>, vector<1x128xf32>
      %c0_41 = arith.constant 0 : index
      %c2 = arith.constant 2 : index
      %c0_42 = arith.constant 0 : index
      %46 = vector.load %arg4[%c0_41, %c2, %c0_42] : memref<1x5x128xf32, #tpu.memory_space<vmem>>, vector<1x1x128xf32>
      %47 = vector.shape_cast %46 : vector<1x1x128xf32> to vector<1x128xf32>
      %48 = vector.shape_cast %45 : vector<1x128xf32> to vector<1x1x128xf32>
      tpu.vector_store %arg4[%c0_41, %c2, %c0_42], %48 {strides = array<i32>} : memref<1x5x128xf32, #tpu.memory_space<vmem>>, vector<1x1x128xf32>,
      %c0_43 = arith.constant 0 : index
      %c0_44 = arith.constant 0 : index
      %49 = vector.load %arg8[%c0_43, %c0_44] : memref<1x128xf32, #tpu.memory_space<vmem>>, vector<1x128xf32>
      %c0_45 = arith.constant 0 : index
      %c3 = arith.constant 3 : index
      %c0_46 = arith.constant 0 : index
      %50 = vector.load %arg4[%c0_45, %c3, %c0_46] : memref<1x5x128xf32, #tpu.memory_space<vmem>>, vector<1x1x128xf32>
      %51 = vector.shape_cast %50 : vector<1x1x128xf32> to vector<1x128xf32>
      %52 = vector.shape_cast %49 : vector<1x128xf32> to vector<1x1x128xf32>
      tpu.vector_store %arg4[%c0_45, %c3, %c0_46], %52 {strides = array<i32>} : memref<1x5x128xf32, #tpu.memory_space<vmem>>, vector<1x1x128xf32>,
      %c0_47 = arith.constant 0 : index
      %c0_48 = arith.constant 0 : index
      %53 = vector.load %arg9[%c0_47, %c0_48] : memref<1x128xf32, #tpu.memory_space<vmem>>, vector<1x128xf32>
      %c0_49 = arith.constant 0 : index
      %c4 = arith.constant 4 : index
      %c0_50 = arith.constant 0 : index
      %54 = vector.load %arg4[%c0_49, %c4, %c0_50] : memref<1x5x128xf32, #tpu.memory_space<vmem>>, vector<1x1x128xf32>
      %55 = vector.shape_cast %54 : vector<1x1x128xf32> to vector<1x128xf32>
      %56 = vector.shape_cast %53 : vector<1x128xf32> to vector<1x1x128xf32>
      tpu.vector_store %arg4[%c0_49, %c4, %c0_50], %56 {strides = array<i32>} : memref<1x5x128xf32, #tpu.memory_space<vmem>>, vector<1x1x128xf32>,
    } else {
    }
    return
  }
  func.func @transform_0(%arg0: i32, %arg1: i32) -> (i32, i32) {
    %c1_i32 = arith.constant 1 : i32
    %0 = arith.muli %arg0, %c1_i32 : i32
    %1 = arith.addi %0, %arg1 : i32
    %c0_i32 = arith.constant 0 : i32
    %c0_i32_0 = arith.constant 0 : i32
    return %1, %c0_i32 : i32, i32
  }
  func.func @transform_1(%arg0: i32, %arg1: i32) -> (i32, i32) {
    %c1_i32 = arith.constant 1 : i32
    %0 = arith.muli %arg0, %c1_i32 : i32
    %1 = arith.addi %0, %arg1 : i32
    %c0_i32 = arith.constant 0 : i32
    %c0_i32_0 = arith.constant 0 : i32
    return %1, %c0_i32 : i32, i32
  }
  func.func @transform_2(%arg0: i32, %arg1: i32) -> (i32, i32, i32) {
    %c0_i32 = arith.constant 0 : i32
    %c0_i32_0 = arith.constant 0 : i32
    %c0_i32_1 = arith.constant 0 : i32
    return %arg0, %c0_i32, %c0_i32_0 : i32, i32, i32
  }
}

</mosaic_0001>

<llo_original>
// kernel: _device_fn.1
$region0: #{_device_fn.1}
  #allocation0 [shape = 'u32[]', space=smem, size = 0x4, offset = 0x4, fixed_abs, tag = 'smem constant byte address 0x4 - core index']
  #allocation1 [shape = 'u32[144,128]{1,0:T(1,128)}', space=vmem, size = 0x12000, scoped, tag = 'internal scratch']
  #allocation2 [shape = 'f32[1,128]{1,0:T(1,128)}', space=vmem, size = 0x200, scoped, tag = 'scratch operand']
  #allocation3 [shape = 'f32[1,128]{1,0:T(1,128)}', space=vmem, size = 0x200, scoped, tag = 'scratch operand']
  #allocation4 [shape = 'f32[1,128]{1,0:T(1,128)}', space=vmem, size = 0x200, scoped, tag = 'scratch operand']
  #allocation5 [shape = 'f32[1,128]{1,0:T(1,128)}', space=vmem, size = 0x200, scoped, tag = 'scratch operand']
  #allocation6 [shape = 'f32[1,128]{1,0:T(1,128)}', space=vmem, size = 0x200, scoped, tag = 'scratch operand']
  %s0 = inlined_call_operand.vmem [shape: f32[16,128], index: 0, kind: input, shape index: {}]
  %s1 = inlined_call_operand.vmem [shape: f32[16,128], index: 1, kind: input, shape index: {}]
  %s2 = inlined_call_operand.vmem [shape: f32[1,5,128], index: 2, kind: output, shape index: {}]
  %s3 = sld [smem:[#allocation0]]
  $region26: #{_device_fn.1} parent=0
    _
  %s5 = ssub.s32 1, %s3
  %s6 = scalar_select 0, %s5, %s3
  // Predicated region
  $region2: #{_device_fn.1} parent=0 // pred_check
    _
  $region3: #{_device_fn.1} parent=0 // pred_check_branch
    %8 = sbr.rel (0) target = $region5
  $region4: #{_device_fn.1} parent=0 // pred_region
    %s9 = sadd.s32 0, 0
    %s10 = smul.u32 2, %s9
    %p11 = scmp.lt.s32.totalorder %s10, 1
    %s12 = scalar_select %p11, %s10, 1
    %s13 = smul.addr %s12, 8
    %s14 = scalar_lea.vmem %s0, %s13
    %s15 = sadd.s32 0, 0
    %s16 = smul.u32 2, %s15
  $region5: #{_device_fn.1} parent=0 // pred_fallthru
    _
  // Predicated region
  $region6: #{_device_fn.1} parent=0 // pred_check
    _
  $region7: #{_device_fn.1} parent=0 // pred_check_branch
    %18 = sbr.rel (0) target = $region9
  $region8: #{_device_fn.1} parent=0 // pred_region
    %s19 = sadd.s32 0, 0
    %s20 = smul.u32 2, %s19
    %p21 = scmp.lt.s32.totalorder %s20, 1
    %s22 = scalar_select %p21, %s20, 1
    %s23 = smul.addr %s22, 8
    %s24 = scalar_lea.vmem %s1, %s23
    %s25 = sadd.s32 0, 0
    %s26 = smul.u32 2, %s25
  $region9: #{_device_fn.1} parent=0 // pred_fallthru
    _
  %s27 = sadd.s32 0, 0
  %s28 = smul.u32 2, %s27
  %p29 = scmp.lt.s32.totalorder %s28, 1
  %s30 = scalar_select %p29, %s28, 1
  %s31 = smul.addr %s30, 8
  %s32 = scalar_lea.vmem %s0, %s31
  %s33 = sadd.s32 0, 0
  %s34 = smul.u32 2, %s33
  %p35 = scmp.lt.s32.totalorder %s34, 1
  %s36 = scalar_select %p35, %s34, 1
  %s37 = smul.addr %s36, 8
  %s38 = scalar_lea.vmem %s1, %s37
  %s39 = sadd.s32 0, 0
  %s40 = smul.u32 2, %s39
  %p41 = scmp.lt.s32.totalorder %s40, 1
  %s42 = scalar_select %p41, %s40, 1
  %s43 = smul.addr %s42, 8
  %s44 = scalar_lea.vmem %s0, %s43
  %s45 = sadd.s32 0, 0
  %s46 = smul.u32 2, %s45
  %s47 = sadd.s32 0, 0
  %s48 = smul.u32 2, %s47
  %p49 = scmp.lt.s32.totalorder %s48, 1
  %s50 = scalar_select %p49, %s48, 1
  %s51 = smul.addr %s50, 8
  %s52 = scalar_lea.vmem %s1, %s51
  %s53 = sadd.s32 0, 0
  %s54 = smul.u32 2, %s53
  %p55 = scmp.eq.s32.totalorder 0, 0
  // Predicated region
  $region10: #{_device_fn.1} parent=0 // pred_check
    %p56 = pneg %p55
  $region11: #{_device_fn.1} parent=0 // pred_check_branch
    %58 = sbr.rel (%p56) target = $region13
  $region12: #{_device_fn.1} parent=0 // pred_region
    %59 = vst [vmem:[#allocation2] sm:$0x1] 0.0
    %60 = vst [vmem:[#allocation3] sm:$0x1] 0.0
    %61 = vst [vmem:[#allocation4] sm:$0x1] 0.0
    %62 = vst [vmem:[#allocation5] sm:$0x1] 0.0
    %63 = vst [vmem:[#allocation6] sm:$0x1] 0.0
  $region13: #{_device_fn.1} parent=0 // pred_fallthru
    _
  %v64 = vld [vmem:[%s44] sm:$0xff]
  %v65 = vld [vmem:[%s44 + $0x8] sm:$0xff]
  %v66 = vld [vmem:[%s52] sm:$0xff]
  %v67 = vld [vmem:[%s52 + $0x8] sm:$0xff]
  %v68 = vsub.f32 %v64, %v66
  %v69 = vsub.f32 %v65, %v67
  %v70 = vld [vmem:[#allocation2] sm:$0x1]
  %v71 = vmul.f32 %v68, %v68
  %v72 = vmul.f32 %v69, %v69
  %v73 = vadd.f32 %v71, %v72
  %v74 = vrot.slane %v73, 4
  %v75 = vadd.f32 %v73, %v74
  %v76 = vrot.slane %v75, 2
  %v77 = vadd.f32 %v75, %v76
  %v78 = vrot.slane %v77, 1
  %v79 = vadd.f32 %v77, %v78
  %v80 = vadd.f32 %v70, %v79
  %81 = vst [vmem:[#allocation2] sm:$0x1] %v80
  %v82 = vld [vmem:[#allocation3] sm:$0x1]
  %v83 = vand.u32 2147483647, %v68
  %v84 = vand.u32 2147483647, %v69
  %v85 = vadd.f32 %v83, %v84
  %v86 = vrot.slane %v85, 4
  %v87 = vadd.f32 %v85, %v86
  %v88 = vrot.slane %v87, 2
  %v89 = vadd.f32 %v87, %v88
  %v90 = vrot.slane %v89, 1
  %v91 = vadd.f32 %v89, %v90
  %v92 = vadd.f32 %v82, %v91
  %93 = vst [vmem:[#allocation3] sm:$0x1] %v92
  %v94 = vld [vmem:[#allocation4] sm:$0x1]
  %v95 = vmul.f32 %v64, %v66
  %v96 = vmul.f32 %v65, %v67
  %v97 = vadd.f32 %v95, %v96
  %v98 = vrot.slane %v97, 4
  %v99 = vadd.f32 %v97, %v98
  %v100 = vrot.slane %v99, 2
  %v101 = vadd.f32 %v99, %v100
  %v102 = vrot.slane %v101, 1
  %v103 = vadd.f32 %v101, %v102
  %v104 = vadd.f32 %v94, %v103
  %105 = vst [vmem:[#allocation4] sm:$0x1] %v104
  %v106 = vld [vmem:[#allocation5] sm:$0x1]
  %v107 = vadd.f32 %v64, %v65
  %v108 = vrot.slane %v107, 4
  %v109 = vadd.f32 %v107, %v108
  %v110 = vrot.slane %v109, 2
  %v111 = vadd.f32 %v109, %v110
  %v112 = vrot.slane %v111, 1
  %v113 = vadd.f32 %v111, %v112
  %v114 = vadd.f32 %v106, %v113
  %115 = vst [vmem:[#allocation5] sm:$0x1] %v114
  %v116 = vld [vmem:[#allocation6] sm:$0x1]
  %v117 = vadd.f32 %v66, %v67
  %v118 = vrot.slane %v117, 4
  %v119 = vadd.f32 %v117, %v118
  %v120 = vrot.slane %v119, 2
  %v121 = vadd.f32 %v119, %v120
  %v122 = vrot.slane %v121, 1
  %v123 = vadd.f32 %v121, %v122
  %v124 = vadd.f32 %v116, %v123
  %125 = vst [vmem:[#allocation6] sm:$0x1] %v124
  // Predicated region
  $region14: #{_device_fn.1} parent=0 // pred_check
    %p126 = pneg %p55
  $region15: #{_device_fn.1} parent=0 // pred_check_branch
    %128 = sbr.rel (%p126) target = $region17
  $region16: #{_device_fn.1} parent=0 // pred_region
    %v129 = vld [vmem:[#allocation2] sm:$0x1]
    %130 = vst [vmem:[%s2] sm:$0x1] %v129
    %v131 = vld [vmem:[#allocation3] sm:$0x1]
    %132 = vst [vmem:[%s2 + $0x1] sm:$0x1] %v131
    %v133 = vld [vmem:[#allocation4] sm:$0x1]
    %134 = vst [vmem:[%s2 + $0x2] sm:$0x1] %v133
    %v135 = vld [vmem:[#allocation5] sm:$0x1]
    %136 = vst [vmem:[%s2 + $0x3] sm:$0x1] %v135
    %v137 = vld [vmem:[#allocation6] sm:$0x1]
    %138 = vst [vmem:[%s2 + $0x4] sm:$0x1] %v137
  $region17: #{_device_fn.1} parent=0 // pred_fallthru
    _
  // Predicated region
  $region18: #{_device_fn.1} parent=0 // pred_check
    _
  $region19: #{_device_fn.1} parent=0 // pred_check_branch
    %140 = sbr.rel (0) target = $region21
  $region20: #{_device_fn.1} parent=0 // pred_region
    _
  $region21: #{_device_fn.1} parent=0 // pred_fallthru
    _
  // Predicated region
  $region22: #{_device_fn.1} parent=0 // pred_check
    _
  $region23: #{_device_fn.1} parent=0 // pred_check_branch
    %142 = sbr.rel (0) target = $region25
  $region24: #{_device_fn.1} parent=0 // pred_region
    _
  $region25: #{_device_fn.1} parent=0 // pred_fallthru
    _

</llo_original>
